<compile_context>
chip_gen: v7x
topology: tpu7x:2x2x1
jax: 0.10.0
libtpu: 0.0.40
codegen_flags: <defaults>
</compile_context>

<pallas_src>
import functools

import jax
import jax.numpy as jnp
from jax.experimental import pallas as pl
from jax.experimental.pallas import tpu as pltpu

LANE = 128


def _round_up(n, m):
    return ((n + m - 1) // m) * m


# ----------------------------- Pallas kernel ------------------------------- #
def _fc_fused_kernel(*refs, num_layers):
    # refs = (x_tile, w_0, b_0, w_1, b_1, ..., w_{L-1}, b_{L-1}, out_tile)
    x_ref = refs[0]
    o_ref = refs[-1]
    h = x_ref[...]                                   # f32 (TILE_B, in_dim)
    for i in range(num_layers):
        w_ref = refs[1 + 2 * i]                      # bf16, BN scale folded in
        b_ref = refs[2 + 2 * i]                      # f32 (1, N_pad)
        # bf16 operands on the MXU, f32 accumulation; f32 epilogue.
        h = jnp.dot(h.astype(jnp.bfloat16), w_ref[...],
                    preferred_element_type=jnp.float32)
        h = h + b_ref[...]
        if i < num_layers - 1:                       # hidden layers: ReLU
            h = jnp.maximum(h, 0.0)
    o_ref[...] = h.astype(o_ref.dtype)


def fc_forward(x, weights, biases, out_features, *, tile_b=None, trim_output=True):
    """Fused FC stack.  weights[i]: (K_i, N_i) lane-padded bf16 (BN folded),
    biases[i]: (1, N_i) f32.  Returns (B, out_features) f32, or the lane-dense
    padded slab if trim_output=False."""
    B, in_dim = x.shape
    num_layers = len(weights)
    n_pad = weights[-1].shape[1]

    if tile_b is None:
        # Fill the MXU rows (128 on v5e, 256 on v6e/v7x) when the batch allows,
        # capped so tiles stay trivially inside v7x's 32 MiB scoped VMEM.
        tile_b = min(512, _round_up(B, 8))
    tile_b = max(8, _round_up(tile_b, 8))

    grid = pl.cdiv(B, tile_b)
    b_pad = grid * tile_b
    if b_pad != B:
        x = jnp.pad(x, ((0, b_pad - B), (0, 0)))     # extra rows trimmed below

    args = [x]
    for w, b in zip(weights, biases):
        args += [w, b]

    # Activations stream through the pipeline; weights/biases use constant
    # index_maps so they stay VMEM-resident across all grid steps.
    def const_spec(shape):
        return pl.BlockSpec(shape, lambda i: (0, 0))

    in_specs = [pl.BlockSpec((tile_b, in_dim), lambda i: (i, 0))]
    for w, b in zip(weights, biases):
        in_specs.append(const_spec(w.shape))
        in_specs.append(const_spec(b.shape))
    out_spec = pl.BlockSpec((tile_b, n_pad), lambda i: (i, 0))

    flops = 2 * b_pad * sum(w.shape[0] * w.shape[1] for w in weights)
    bytes_accessed = (x.size * 4 + b_pad * n_pad * 4
                      + sum(w.size * 2 + b.size * 4 for w, b in zip(weights, biases)))

    kernel = functools.partial(_fc_fused_kernel, num_layers=num_layers)
    out_pad = pl.pallas_call(
        kernel,
        out_shape=jax.ShapeDtypeStruct((b_pad, n_pad), jnp.float32),
        grid=(grid,),
        in_specs=in_specs,
        out_specs=out_spec,
        compiler_params=pltpu.CompilerParams(
            dimension_semantics=("parallel",)),
        cost_estimate=pl.CostEstimate(flops=flops, transcendentals=0,
                                      bytes_accessed=bytes_accessed),
    )(*args)

    if not trim_output:
        return out_pad                                # lane-dense (b_pad, 128)
    return out_pad[:B, :out_features]


# ------------------------------ FC params ----------------------------------- #
def init_fc_params(key, dims, final_out=82, eps=1e-5):
    """Kernel-side params (padded, BN-scale-folded, bf16 weights) plus
    reference-side (unpadded f32) params, mirroring the PyTorch module."""
    keys = jax.random.split(key, len(dims))

    kernel_ws, kernel_bs = [], []
    ref_layers = []

    # Hidden MLP layers: Linear(in, out, bias=False) + BatchNorm1d(out) + ReLU
    for i in range(1, len(dims)):
        in_dim, out_dim = dims[i - 1], dims[i]
        bound = 1.0 / jnp.sqrt(in_dim)
        # PyTorch stores (out, in); keep (in, out) so the kernel does x @ W.
        w = jax.random.uniform(keys[i - 1], (in_dim, out_dim),
                               minval=-bound, maxval=bound, dtype=jnp.float32)
        # BatchNorm1d defaults: gamma=1, beta=0, running_mean=0, running_var=1
        gamma = jnp.ones((out_dim,), jnp.float32)
        beta = jnp.zeros((out_dim,), jnp.float32)
        running_mean = jnp.zeros((out_dim,), jnp.float32)
        running_var = jnp.ones((out_dim,), jnp.float32)
        scale = gamma / jnp.sqrt(running_var + eps)
        shift = beta - running_mean * scale

        ref_layers.append({"w": w, "scale": scale, "shift": shift})

        # Fold BN scale into weights; zero-pad to lane-dense shapes; cast bf16.
        in_pad = in_dim if i == 1 else _round_up(dims[i - 1], LANE)
        out_pad = _round_up(out_dim, LANE)
        w_folded = w * scale[None, :]
        w_pad = jnp.zeros((in_pad, out_pad), jnp.float32)
        w_pad = w_pad.at[:in_dim, :out_dim].set(w_folded)
        b_pad = jnp.zeros((1, out_pad), jnp.float32)
        b_pad = b_pad.at[0, :out_dim].set(shift)
        kernel_ws.append(w_pad.astype(jnp.bfloat16))
        kernel_bs.append(b_pad)

    # Final Linear(dims[-1], final_out) with bias (no BN, no ReLU).
    in_dim = dims[-1]
    bound = 1.0 / jnp.sqrt(in_dim)
    kw, kb = jax.random.split(keys[-1])
    wf = jax.random.uniform(kw, (in_dim, final_out),
                            minval=-bound, maxval=bound, dtype=jnp.float32)
    bf = jax.random.uniform(kb, (final_out,),
                            minval=-bound, maxval=bound, dtype=jnp.float32)
    ref_layers.append({"w": wf, "scale": jnp.ones((final_out,), jnp.float32),
                       "shift": bf})

    in_pad = _round_up(in_dim, LANE)
    out_pad = _round_up(final_out, LANE)
    wf_pad = jnp.zeros((in_pad, out_pad), jnp.float32).at[:in_dim, :final_out].set(wf)
    bf_pad = jnp.zeros((1, out_pad), jnp.float32).at[0, :final_out].set(bf)
    kernel_ws.append(wf_pad.astype(jnp.bfloat16))
    kernel_bs.append(bf_pad)

    return kernel_ws, kernel_bs, ref_layers


# ------------------------------ reference ----------------------------------- #
def fc_reference(ref_layers, x):
    out = x
    for layer in ref_layers[:-1]:
        out = jnp.maximum(out @ layer["w"] * layer["scale"][None, :]
                          + layer["shift"][None, :], 0.0)
    last = ref_layers[-1]
    return out @ last["w"] * last["scale"][None, :] + last["shift"][None, :]


if __name__ == "__main__":
    dims = [32, 64, 48]          # FC(dims): 32 -> 64 -> 48 -> 82
    final_out = 82
    batch = 72                   # non-multiple of the tile to exercise padding

    key = jax.random.PRNGKey(0)
    kx, kp = jax.random.split(key)
    x = jax.random.normal(kx, (batch, dims[0]), dtype=jnp.float32)
    kernel_ws, kernel_bs, ref_layers = init_fc_params(kp, dims, final_out)

    # tile_b=32 -> grid of 3 steps: exercises the pipelined batch grid at a
    # small size (auto tile_b fills MXU rows at production batch sizes).
    out = jax.block_until_ready(
        fc_forward(x, kernel_ws, kernel_bs, final_out, tile_b=32))
    ref = fc_reference(ref_layers, x)

    assert out.shape == (batch, final_out), out.shape
    # bf16 matmul operands (f32 accumulation) -> ~1e-3 relative rounding.
    assert jnp.allclose(out, ref, atol=5e-2, rtol=5e-2), "mismatch vs reference"
    print("KERNEL_OK")
</pallas_src>

<mosaic_0001>
module attributes {stable_mosaic.version = 11 : i64} {
  func.func @_fc_fused_kernel(%arg0: i32, %arg1: memref<32x32xf32, #tpu.memory_space<vmem>>, %arg2: memref<32x128xbf16, #tpu.memory_space<vmem>>, %arg3: memref<1x128xf32, #tpu.memory_space<vmem>>, %arg4: memref<128x128xbf16, #tpu.memory_space<vmem>>, %arg5: memref<1x128xf32, #tpu.memory_space<vmem>>, %arg6: memref<128x128xbf16, #tpu.memory_space<vmem>>, %arg7: memref<1x128xf32, #tpu.memory_space<vmem>>, %arg8: memref<32x128xf32, #tpu.memory_space<vmem>>) attributes {dimension_semantics = [#tpu.dimension_semantics<parallel>], iteration_bounds = array<i64: 3>, scalar_prefetch = 0 : i64, scratch_operands = 0 : i64, tpu.core_type = #tpu.core_type<tc>, window_params = [{transform_indices = @transform_0, window_bounds = array<i64: 32, 32>}, {pipeline_mode = #tpu.pipeline_mode<synchronous>, transform_indices = @transform_1, window_bounds = array<i64: 32, 128>}, {pipeline_mode = #tpu.pipeline_mode<synchronous>, transform_indices = @transform_2, window_bounds = array<i64: 1, 128>}, {pipeline_mode = #tpu.pipeline_mode<synchronous>, transform_indices = @transform_3, window_bounds = array<i64: 128, 128>}, {pipeline_mode = #tpu.pipeline_mode<synchronous>, transform_indices = @transform_4, window_bounds = array<i64: 1, 128>}, {pipeline_mode = #tpu.pipeline_mode<synchronous>, transform_indices = @transform_5, window_bounds = array<i64: 128, 128>}, {pipeline_mode = #tpu.pipeline_mode<synchronous>, transform_indices = @transform_6, window_bounds = array<i64: 1, 128>}, {transform_indices = @transform_7, window_bounds = array<i64: 32, 128>}]} {
    %c0 = arith.constant 0 : index
    %c0_0 = arith.constant 0 : index
    %0 = vector.load %arg1[%c0, %c0_0] : memref<32x32xf32, #tpu.memory_space<vmem>>, vector<32x32xf32>
    %1 = arith.truncf %0 : vector<32x32xf32> to vector<32x32xbf16>
    %c0_1 = arith.constant 0 : index
    %c0_2 = arith.constant 0 : index
    %2 = vector.load %arg2[%c0_1, %c0_2] : memref<32x128xbf16, #tpu.memory_space<vmem>>, vector<32x128xbf16>
    %cst = arith.constant dense<0.000000e+00> : vector<32x128xf32>
    %3 = tpu.matmul %1, %2, %cst {dimension_numbers = #tpu.dot_dimension_numbers<[1], [0], [0], [1], [0, 0, 1, 1], [], []>} : vector<32x32xbf16>, vector<32x128xbf16>, vector<32x128xf32> -> vector<32x128xf32>
    %c0_3 = arith.constant 0 : index
    %c0_4 = arith.constant 0 : index
    %4 = vector.load %arg3[%c0_3, %c0_4] : memref<1x128xf32, #tpu.memory_space<vmem>>, vector<1x128xf32>
    %5 = vector.broadcast %4 : vector<1x128xf32> to vector<32x128xf32>
    %6 = arith.addf %3, %5 : vector<32x128xf32>
    %cst_5 = arith.constant 0.000000e+00 : f32
    %7 = vector.broadcast %cst_5 : f32 to vector<32x128xf32>
    %8 = arith.maximumf %6, %7 : vector<32x128xf32>
    %9 = arith.truncf %8 : vector<32x128xf32> to vector<32x128xbf16>
    %c0_6 = arith.constant 0 : index
    %c0_7 = arith.constant 0 : index
    %10 = vector.load %arg4[%c0_6, %c0_7] : memref<128x128xbf16, #tpu.memory_space<vmem>>, vector<128x128xbf16>
    %cst_8 = arith.constant dense<0.000000e+00> : vector<32x128xf32>
    %11 = tpu.matmul %9, %10, %cst_8 {dimension_numbers = #tpu.dot_dimension_numbers<[1], [0], [0], [1], [0, 0, 1, 1], [], []>} : vector<32x128xbf16>, vector<128x128xbf16>, vector<32x128xf32> -> vector<32x128xf32>
    %c0_9 = arith.constant 0 : index
    %c0_10 = arith.constant 0 : index
    %12 = vector.load %arg5[%c0_9, %c0_10] : memref<1x128xf32, #tpu.memory_space<vmem>>, vector<1x128xf32>
    %13 = vector.broadcast %12 : vector<1x128xf32> to vector<32x128xf32>
    %14 = arith.addf %11, %13 : vector<32x128xf32>
    %cst_11 = arith.constant 0.000000e+00 : f32
    %15 = vector.broadcast %cst_11 : f32 to vector<32x128xf32>
    %16 = arith.maximumf %14, %15 : vector<32x128xf32>
    %17 = arith.truncf %16 : vector<32x128xf32> to vector<32x128xbf16>
    %c0_12 = arith.constant 0 : index
    %c0_13 = arith.constant 0 : index
    %18 = vector.load %arg6[%c0_12, %c0_13] : memref<128x128xbf16, #tpu.memory_space<vmem>>, vector<128x128xbf16>
    %cst_14 = arith.constant dense<0.000000e+00> : vector<32x128xf32>
    %19 = tpu.matmul %17, %18, %cst_14 {dimension_numbers = #tpu.dot_dimension_numbers<[1], [0], [0], [1], [0, 0, 1, 1], [], []>} : vector<32x128xbf16>, vector<128x128xbf16>, vector<32x128xf32> -> vector<32x128xf32>
    %c0_15 = arith.constant 0 : index
    %c0_16 = arith.constant 0 : index
    %20 = vector.load %arg7[%c0_15, %c0_16] : memref<1x128xf32, #tpu.memory_space<vmem>>, vector<1x128xf32>
    %21 = vector.broadcast %20 : vector<1x128xf32> to vector<32x128xf32>
    %22 = arith.addf %19, %21 : vector<32x128xf32>
    %c0_17 = arith.constant 0 : index
    %c0_18 = arith.constant 0 : index
    %23 = vector.load %arg8[%c0_17, %c0_18] : memref<32x128xf32, #tpu.memory_space<vmem>>, vector<32x128xf32>
    tpu.vector_store %arg8[%c0_17, %c0_18], %22 {strides = array<i32>} : memref<32x128xf32, #tpu.memory_space<vmem>>, vector<32x128xf32>,
    return
  }
  func.func @transform_0(%arg0: i32) -> (i32, i32) {
    %c0_i32 = arith.constant 0 : i32
    %c0_i32_0 = arith.constant 0 : i32
    return %arg0, %c0_i32 : i32, i32
  }
  func.func @transform_1(%arg0: i32) -> (i32, i32) {
    %c0_i32 = arith.constant 0 : i32
    %c0_i32_0 = arith.constant 0 : i32
    %c0_i32_1 = arith.constant 0 : i32
    return %c0_i32, %c0_i32_0 : i32, i32
  }
  func.func @transform_2(%arg0: i32) -> (i32, i32) {
    %c0_i32 = arith.constant 0 : i32
    %c0_i32_0 = arith.constant 0 : i32
    %c0_i32_1 = arith.constant 0 : i32
    return %c0_i32, %c0_i32_0 : i32, i32
  }
  func.func @transform_3(%arg0: i32) -> (i32, i32) {
    %c0_i32 = arith.constant 0 : i32
    %c0_i32_0 = arith.constant 0 : i32
    %c0_i32_1 = arith.constant 0 : i32
    return %c0_i32, %c0_i32_0 : i32, i32
  }
  func.func @transform_4(%arg0: i32) -> (i32, i32) {
    %c0_i32 = arith.constant 0 : i32
    %c0_i32_0 = arith.constant 0 : i32
    %c0_i32_1 = arith.constant 0 : i32
    return %c0_i32, %c0_i32_0 : i32, i32
  }
  func.func @transform_5(%arg0: i32) -> (i32, i32) {
    %c0_i32 = arith.constant 0 : i32
    %c0_i32_0 = arith.constant 0 : i32
    %c0_i32_1 = arith.constant 0 : i32
    return %c0_i32, %c0_i32_0 : i32, i32
  }
  func.func @transform_6(%arg0: i32) -> (i32, i32) {
    %c0_i32 = arith.constant 0 : i32
    %c0_i32_0 = arith.constant 0 : i32
    %c0_i32_1 = arith.constant 0 : i32
    return %c0_i32, %c0_i32_0 : i32, i32
  }
  func.func @transform_7(%arg0: i32) -> (i32, i32) {
    %c0_i32 = arith.constant 0 : i32
    %c0_i32_0 = arith.constant 0 : i32
    return %arg0, %c0_i32 : i32, i32
  }
}

</mosaic_0001>

<llo_original>
// kernel: tpu_custom_call.1
$region0: #{tpu_custom_call.1}
  #allocation0 [shape = 'u32[]', space=smem, size = 0x4, offset = 0x4, fixed_abs, tag = 'smem constant byte address 0x4 - core index']
  #allocation1 [shape = 'u32[144,128]{1,0:T(1,128)}', space=vmem, size = 0x12000, scoped, tag = 'internal scratch']
  %s0 = inlined_call_operand.vmem [shape: f32[96,32], index: 0, kind: input, shape index: {}]
  %s1 = inlined_call_operand.hbm [shape: bf16[32,128], index: 1, kind: input, shape index: {}]
  %s2 = inlined_call_operand.vmem [shape: f32[1,128], index: 2, kind: input, shape index: {}]
  %s3 = inlined_call_operand.vmem [shape: bf16[128,128], index: 3, kind: input, shape index: {}]
  %s4 = inlined_call_operand.vmem [shape: f32[1,128], index: 4, kind: input, shape index: {}]
  %s5 = inlined_call_operand.vmem [shape: bf16[128,128], index: 5, kind: input, shape index: {}]
  %s6 = inlined_call_operand.vmem [shape: f32[1,128], index: 6, kind: input, shape index: {}]
  %s7 = inlined_call_operand.hbm [shape: f32[96,128], index: 7, kind: output, shape index: {}]
  %s8 = sld [smem:[#allocation0]]
  $region65: #{tpu_custom_call.1} parent=0
    _
  %s10 = ssub.s32 1, %s8
  %s11 = scalar_select 0, %s10, %s8
  $region1: #{tpu_custom_call.1} parent=0
    #allocation2 [shape = 'u8[8192]{0}', space=vmem, size = 0x2000, scoped, tag = 'input window, operand 1, single buffered']
    #allocation3 [shape = 's32[2]{0}', space=sflag, size = 0x8, scoped, tag = 'scoped memory for tpu_custom_call.1']
    #allocation4 [shape = 's32[2]{0}', space=sflag, size = 0x8, scoped, tag = 'scoped memory for tpu_custom_call.1']
    #allocation5 [shape = 'u8[32768]{0}', space=vmem, size = 0x8000, scoped, tag = 'output window, operand 0']
    %12 = vsyncpa [#allocation3], 0
    %13 = vsyncpa [#allocation4], 0
    %s14 = scalar_lea.sflag [#allocation4], 1
    %15 = vsyncpa %s14, 0
    loop: start=0, step=1, limit=5
    $region2: #{tpu_custom_call.1} parent=1 // loop_pre_header
      _
    $region3: #{tpu_custom_call.1} parent=1 // loop_header
      %s17 = sphi 0, %s21
      %p18 = scmp.ge.s32.totalorder %s17, 5
      %s27 = sphi 0, %s29
      %s30 = sphi 0, %s27
      %s31 = sphi 0, %s30
      %s47 = sphi 0, %s31
      %s51 = sphi 0, %s51
      %s53 = sphi 0, %s51
      %s54 = sphi 0, %s53
      %s68 = sphi 0, %s54
      %s72 = sphi 0, %s72
      %s74 = sphi 0, %s72
      %s75 = sphi 0, %s74
      %s89 = sphi 0, %s75
      %s93 = sphi 0, %s93
      %s95 = sphi 0, %s93
      %s96 = sphi 0, %s95
      %s110 = sphi 0, %s96
      %s114 = sphi 0, %s114
      %s116 = sphi 0, %s114
      %s117 = sphi 0, %s116
      %s131 = sphi 0, %s117
      %s135 = sphi 0, %s135
      %s137 = sphi 0, %s135
      %s138 = sphi 0, %s137
      %s152 = sphi 0, %s138
      %s156 = sphi 0, %s156
      %s158 = sphi 0, %s156
      %s159 = sphi 0, %s158
      %s173 = sphi 0, %s159
      %s179 = sphi 0, %s181
      %s182 = sphi 0, %s179
      %s183 = sphi 0, %s182
      %s199 = sphi 0, %s183
    $region4: #{tpu_custom_call.1} parent=1 // loop_header_branch
      %20 = sbr.rel (%p18) target = $region8
    $region5: #{tpu_custom_call.1} parent=1 // loop_body
      %s22 = ssub.s32 %s17, 1
      %s23 = ssub.s32 %s17, 2
      %s24 = sadd.s32 %s17, 1
      %s25 = ssub.s32 %s17, %s24
      %p26 = scmp.eq.s32.totalorder %s25, 0
      %s28 = sadd.s32 %s27, 1
      %s29 = scalar_select %p26, %s27, %s28
      %p32 = pneg %p26
      %p33 = scmp.eq.s32.totalorder %s17, 2
      %p34 = por %p32, %p33
      %p35 = scmp.ne.s32.totalorder %s27, %s30
      %p36 = scmp.eq.s32.totalorder %s17, 0
      %p37 = por %p35, %p36
      %p38 = scmp.ne.s32.totalorder %s27, %s30
      %p39 = scmp.eq.s32.totalorder %s22, 2
      %p40 = por %p38, %p39
      %p41 = scmp.ne.s32.totalorder %s30, %s31
      %p42 = scmp.eq.s32.totalorder %s22, 0
      %p43 = por %p41, %p42
      %p44 = scmp.ne.s32.totalorder %s30, %s31
      %p45 = scmp.eq.s32.totalorder %s23, 2
      %p46 = por %p44, %p45
      %p48 = scmp.ne.s32.totalorder %s31, %s47
      %p49 = scmp.eq.s32.totalorder %s23, 0
      %p50 = por %p48, %p49
      %s52 = sadd.s32 %s51, 1
      %p55 = scmp.eq.s32.totalorder %s17, 2
      %p56 = scmp.ne.s32.totalorder %s51, %s53
      %p57 = scmp.eq.s32.totalorder %s17, 0
      %p58 = por %p56, %p57
      %p59 = scmp.ne.s32.totalorder %s51, %s53
      %p60 = scmp.eq.s32.totalorder %s22, 2
      %p61 = por %p59, %p60
      %p62 = scmp.ne.s32.totalorder %s53, %s54
      %p63 = scmp.eq.s32.totalorder %s22, 0
      %p64 = por %p62, %p63
      %p65 = scmp.ne.s32.totalorder %s53, %s54
      %p66 = scmp.eq.s32.totalorder %s23, 2
      %p67 = por %p65, %p66
      %p69 = scmp.ne.s32.totalorder %s54, %s68
      %p70 = scmp.eq.s32.totalorder %s23, 0
      %p71 = por %p69, %p70
      %s73 = sadd.s32 %s72, 1
      %p76 = scmp.eq.s32.totalorder %s17, 2
      %p77 = scmp.ne.s32.totalorder %s72, %s74
      %p78 = scmp.eq.s32.totalorder %s17, 0
      %p79 = por %p77, %p78
      %p80 = scmp.ne.s32.totalorder %s72, %s74
      %p81 = scmp.eq.s32.totalorder %s22, 2
      %p82 = por %p80, %p81
      %p83 = scmp.ne.s32.totalorder %s74, %s75
      %p84 = scmp.eq.s32.totalorder %s22, 0
      %p85 = por %p83, %p84
      %p86 = scmp.ne.s32.totalorder %s74, %s75
      %p87 = scmp.eq.s32.totalorder %s23, 2
      %p88 = por %p86, %p87
      %p90 = scmp.ne.s32.totalorder %s75, %s89
      %p91 = scmp.eq.s32.totalorder %s23, 0
      %p92 = por %p90, %p91
      %s94 = sadd.s32 %s93, 1
      %p97 = scmp.eq.s32.totalorder %s17, 2
      %p98 = scmp.ne.s32.totalorder %s93, %s95
      %p99 = scmp.eq.s32.totalorder %s17, 0
      %p100 = por %p98, %p99
      %p101 = scmp.ne.s32.totalorder %s93, %s95
      %p102 = scmp.eq.s32.totalorder %s22, 2
      %p103 = por %p101, %p102
      %p104 = scmp.ne.s32.totalorder %s95, %s96
      %p105 = scmp.eq.s32.totalorder %s22, 0
      %p106 = por %p104, %p105
      %p107 = scmp.ne.s32.totalorder %s95, %s96
      %p108 = scmp.eq.s32.totalorder %s23, 2
      %p109 = por %p107, %p108
      %p111 = scmp.ne.s32.totalorder %s96, %s110
      %p112 = scmp.eq.s32.totalorder %s23, 0
      %p113 = por %p111, %p112
      %s115 = sadd.s32 %s114, 1
      %p118 = scmp.eq.s32.totalorder %s17, 2
      %p119 = scmp.ne.s32.totalorder %s114, %s116
      %p120 = scmp.eq.s32.totalorder %s17, 0
      %p121 = por %p119, %p120
      %p122 = scmp.ne.s32.totalorder %s114, %s116
      %p123 = scmp.eq.s32.totalorder %s22, 2
      %p124 = por %p122, %p123
      %p125 = scmp.ne.s32.totalorder %s116, %s117
      %p126 = scmp.eq.s32.totalorder %s22, 0
      %p127 = por %p125, %p126
      %p128 = scmp.ne.s32.totalorder %s116, %s117
      %p129 = scmp.eq.s32.totalorder %s23, 2
      %p130 = por %p128, %p129
      %p132 = scmp.ne.s32.totalorder %s117, %s131
      %p133 = scmp.eq.s32.totalorder %s23, 0
      %p134 = por %p132, %p133
      %s136 = sadd.s32 %s135, 1
      %p139 = scmp.eq.s32.totalorder %s17, 2
      %p140 = scmp.ne.s32.totalorder %s135, %s137
      %p141 = scmp.eq.s32.totalorder %s17, 0
      %p142 = por %p140, %p141
      %p143 = scmp.ne.s32.totalorder %s135, %s137
      %p144 = scmp.eq.s32.totalorder %s22, 2
      %p145 = por %p143, %p144
      %p146 = scmp.ne.s32.totalorder %s137, %s138
      %p147 = scmp.eq.s32.totalorder %s22, 0
      %p148 = por %p146, %p147
      %p149 = scmp.ne.s32.totalorder %s137, %s138
      %p150 = scmp.eq.s32.totalorder %s23, 2
      %p151 = por %p149, %p150
      %p153 = scmp.ne.s32.totalorder %s138, %s152
      %p154 = scmp.eq.s32.totalorder %s23, 0
      %p155 = por %p153, %p154
      %s157 = sadd.s32 %s156, 1
      %p160 = scmp.eq.s32.totalorder %s17, 2
      %p161 = scmp.ne.s32.totalorder %s156, %s158
      %p162 = scmp.eq.s32.totalorder %s17, 0
      %p163 = por %p161, %p162
      %p164 = scmp.ne.s32.totalorder %s156, %s158
      %p165 = scmp.eq.s32.totalorder %s22, 2
      %p166 = por %p164, %p165
      %p167 = scmp.ne.s32.totalorder %s158, %s159
      %p168 = scmp.eq.s32.totalorder %s22, 0
      %p169 = por %p167, %p168
      %p170 = scmp.ne.s32.totalorder %s158, %s159
      %p171 = scmp.eq.s32.totalorder %s23, 2
      %p172 = por %p170, %p171
      %p174 = scmp.ne.s32.totalorder %s159, %s173
      %p175 = scmp.eq.s32.totalorder %s23, 0
      %p176 = por %p174, %p175
      %s177 = ssub.s32 %s17, %s24
      %p178 = scmp.eq.s32.totalorder %s177, 0
      %s180 = sadd.s32 %s179, 1
      %s181 = scalar_select %p178, %s179, %s180
      %p184 = pneg %p178
      %p185 = scmp.eq.s32.totalorder %s17, 2
      %p186 = por %p184, %p185
      %p187 = scmp.ne.s32.totalorder %s179, %s182
      %p188 = scmp.eq.s32.totalorder %s17, 0
      %p189 = por %p187, %p188
      %p190 = scmp.ne.s32.totalorder %s179, %s182
      %p191 = scmp.eq.s32.totalorder %s22, 2
      %p192 = por %p190, %p191
      %p193 = scmp.ne.s32.totalorder %s182, %s183
      %p194 = scmp.eq.s32.totalorder %s22, 0
      %p195 = por %p193, %p194
      %p196 = scmp.ne.s32.totalorder %s182, %s183
      %p197 = scmp.eq.s32.totalorder %s23, 2
      %p198 = por %p196, %p197
      %p200 = scmp.ne.s32.totalorder %s183, %s199
      %p201 = scmp.eq.s32.totalorder %s23, 0
      %p202 = por %p200, %p201
      %p203 = scmp.le.s32.totalorder 1, %s17
      %p204 = scmp.lt.s32.totalorder %s17, 4
      %p205 = pnand %p203, %p204
      %p206 = pneg %p205
      // Predicated region
      $region9: #{tpu_custom_call.1} parent=5 // pred_check
        _
      $region10: #{tpu_custom_call.1} parent=5 // pred_check_branch
        %208 = sbr.rel (%p205) target = $region12
      $region11: #{tpu_custom_call.1} parent=5 // pred_region
        %s209 = ssub.s32 %s17, 1
        // Predicated region
        $region13: #{tpu_custom_call.1} parent=11 // pred_check
          %p210 = pneg %p64
        $region14: #{tpu_custom_call.1} parent=11 // pred_check_branch
          %212 = sbr.rel (%p210) target = $region16
        $region15: #{tpu_custom_call.1} parent=11 // pred_region
          %s214 = ssub.s32 256, 256
          %215 = vsyncadd [#allocation3], %s214
          %s216 = sshll.u32 [#allocation2], 4
          %s217 = int_to_ptr.vmem [resolvable:$true] %s216
          %222 = dma.hbm_to_vmem [thread:$0]  %s1, 256, %s217, [#allocation3], 64, 64, 4
        $region16: #{tpu_custom_call.1} parent=11 // pred_fallthru
          _
        // Predicated region
        $region17: #{tpu_custom_call.1} parent=11 // pred_check
          %p223 = pneg %p85
        $region18: #{tpu_custom_call.1} parent=11 // pred_check_branch
          %225 = sbr.rel (%p223) target = $region20
        $region19: #{tpu_custom_call.1} parent=11 // pred_region
          _
        $region20: #{tpu_custom_call.1} parent=11 // pred_fallthru
          _
        // Predicated region
        $region21: #{tpu_custom_call.1} parent=11 // pred_check
          %p226 = pneg %p106
        $region22: #{tpu_custom_call.1} parent=11 // pred_check_branch
          %228 = sbr.rel (%p226) target = $region24
        $region23: #{tpu_custom_call.1} parent=11 // pred_region
          _
        $region24: #{tpu_custom_call.1} parent=11 // pred_fallthru
          _
        // Predicated region
        $region25: #{tpu_custom_call.1} parent=11 // pred_check
          %p229 = pneg %p127
        $region26: #{tpu_custom_call.1} parent=11 // pred_check_branch
          %231 = sbr.rel (%p229) target = $region28
        $region27: #{tpu_custom_call.1} parent=11 // pred_region
          _
        $region28: #{tpu_custom_call.1} parent=11 // pred_fallthru
          _
        // Predicated region
        $region29: #{tpu_custom_call.1} parent=11 // pred_check
          %p232 = pneg %p148
        $region30: #{tpu_custom_call.1} parent=11 // pred_check_branch
          %234 = sbr.rel (%p232) target = $region32
        $region31: #{tpu_custom_call.1} parent=11 // pred_region
          _
        $region32: #{tpu_custom_call.1} parent=11 // pred_fallthru
          _
        // Predicated region
        $region33: #{tpu_custom_call.1} parent=11 // pred_check
          %p235 = pneg %p169
        $region34: #{tpu_custom_call.1} parent=11 // pred_check_branch
          %237 = sbr.rel (%p235) target = $region36
        $region35: #{tpu_custom_call.1} parent=11 // pred_region
          _
        $region36: #{tpu_custom_call.1} parent=11 // pred_fallthru
          _
      $region12: #{tpu_custom_call.1} parent=5 // pred_fallthru
        _
      %p238 = scmp.lt.s32.totalorder %s17, 3
      // Predicated region
      $region37: #{tpu_custom_call.1} parent=5 // pred_check
        %p239 = pneg %p238
      $region38: #{tpu_custom_call.1} parent=5 // pred_check_branch
        %241 = sbr.rel (%p239) target = $region40
      $region39: #{tpu_custom_call.1} parent=5 // pred_region
        // Predicated region
        $region41: #{tpu_custom_call.1} parent=39 // pred_check
          %p242 = pneg %p37
        $region42: #{tpu_custom_call.1} parent=39 // pred_check_branch
          %244 = sbr.rel (%p242) target = $region44
        $region43: #{tpu_custom_call.1} parent=39 // pred_region
          %s245 = smul.u32 4, %s17
          %p246 = scmp.lt.s32.totalorder %s245, 11
          %s247 = scalar_select %p246, %s245, 11
          %s248 = smul.addr %s247, 8
          %s249 = scalar_lea.vmem %s0, %s248
          %s250 = smul.u32 4, %s17
        $region44: #{tpu_custom_call.1} parent=39 // pred_fallthru
          _
      $region40: #{tpu_custom_call.1} parent=5 // pred_fallthru
        _
      %p251 = scmp.le.s32.totalorder 1, %s17
      %p252 = scmp.lt.s32.totalorder %s17, 4
      %p253 = pnand %p251, %p252
      %p254 = pneg %p253
      // Predicated region
      $region45: #{tpu_custom_call.1} parent=5 // pred_check
        _
      $region46: #{tpu_custom_call.1} parent=5 // pred_check_branch
        %256 = sbr.rel (%p253) target = $region48
      $region47: #{tpu_custom_call.1} parent=5 // pred_region
        %s257 = ssub.s32 %s17, 1
        // Predicated region
        $region49: #{tpu_custom_call.1} parent=47 // pred_check
          %p258 = pneg %p64
        $region50: #{tpu_custom_call.1} parent=47 // pred_check_branch
          %260 = sbr.rel (%p258) target = $region52
        $region51: #{tpu_custom_call.1} parent=47 // pred_region
          %261 = dma.done [#allocation3], 256
        $region52: #{tpu_custom_call.1} parent=47 // pred_fallthru
          _
        %s262 = smul.u32 4, %s22
        %p263 = scmp.lt.s32.totalorder %s262, 11
        %s264 = scalar_select %p263, %s262, 11
        %s265 = smul.addr %s264, 8
        %s266 = scalar_lea.vmem %s0, %s265
        %p267 = pneg %p43
        %p268 = pneg %p40
        %p269 = pneg %p64
        %p270 = pneg %p61
        %p271 = pneg %p85
        %p272 = pneg %p82
        %p273 = pneg %p106
        %p274 = pneg %p103
        %p275 = pneg %p127
        %p276 = pneg %p124
        %p277 = pneg %p148
        %p278 = pneg %p145
        %p279 = pneg %p169
        %p280 = pneg %p166
        %p281 = pneg %p195
        %p282 = pneg %p192
        %s283 = sand.u32 %s182, 1
        %s284 = scalar_lea.sflag [#allocation4], %s283
        %s285 = sand.u32 %s182, 1
        %s286 = smul.addr %s285, 32
        %s287 = scalar_lea.vmem [#allocation5], %s286
        %s288 = smul.u32 4, %s22
        %p289 = scmp.lt.s32.totalorder %s288, 11
        %s290 = scalar_select %p289, %s288, 11
        %s291 = smul.addr %s290, 8
        %s292 = scalar_lea.vmem %s0, %s291
        %s293 = smul.u32 4, %s22
        %s294 = smul.u32 4, %s22
        %v296 = vld [vmem:[%s292] sm:$0xff]
        %v297 = vld [vmem:[%s292 + $0x8] sm:$0xff]
        %v298 = vld [vmem:[%s292 + $0x10] sm:$0xff]
        %v299 = vld [vmem:[%s292 + $0x18] sm:$0xff]
        %v300 = vpack.c.bf16 %v297, %v296
        %v301 = vpack.c.bf16 %v299, %v298
        %v302 = vld [vmem:[#allocation2] sm:$0xf]
        %v303 = vld [vmem:[#allocation2 + $0x4] sm:$0xf]
        %v304 = vld [vmem:[#allocation2 + $0x8] sm:$0xf]
        %v305 = vld [vmem:[#allocation2 + $0xc] sm:$0xf]
        %v306 = vld [vmem:[%s2] sm:$0x1]
        %v308 = vlaneseq
        %v309 = vshrl.u32 %v308, 7
        %v310 = vsub.s32 0, %v309
        %v311 = vrot.slane %v306, %v310
        %v317 = vunpack.c.l.b16 %v302
        %v318 = vunpack.c.l.b16 %v303
        %v319 = vunpack.c.l.b16 %v304
        %v320 = vunpack.c.l.b16 %v305
        %v321 = vpack.c.b16 %v318, %v317
        %v322 = vpack.c.b16 %v320, %v319
        %vm325 = vcmask 261120
        %v327 = vsel %vm325, %v300, 0
        %v330 = vsel %vm325, %v301, 0
        %332 = vmatprep.subr.bf16.mxu0 0
        %333 = vmatpush1.bf16.msra.mxu0 %v321
        %334 = vmatprep.subr.bf16.mxu0 0
        %335 = vmatpush1.bf16.msra.mxu0 %v322
        %336 = vmatprep.subr.bf16.mxu0 0
        %337 = vmatpush1.bf16.msra.mxu0 0
        %338 = vmatprep.subr.bf16.mxu0 0
        %339 = vmatpush1.bf16.msra.mxu0 0
        %340 = vmatprep.subr.bf16.mxu0 0
        %341 = vmatpush1.bf16.msra.mxu0 0
        %342 = vmatprep.subr.bf16.mxu0 0
        %343 = vmatpush1.bf16.msra.mxu0 0
        %344 = vmatprep.subr.bf16.mxu0 0
        %345 = vmatpush1.bf16.msra.mxu0 0
        %346 = vmatprep.subr.bf16.mxu0 0
        %347 = vmatpush1.bf16.msra.mxu0 0
        %348 = vmatprep.subr.bf16.mxu0 0
        %349 = vmatpush1.bf16.msra.mxu0 0
        %350 = vmatprep.subr.bf16.mxu0 0
        %351 = vmatpush1.bf16.msra.mxu0 0
        %352 = vmatprep.subr.bf16.mxu0 0
        %353 = vmatpush1.bf16.msra.mxu0 0
        %354 = vmatprep.subr.bf16.mxu0 0
        %355 = vmatpush1.bf16.msra.mxu0 0
        %356 = vmatprep.subr.bf16.mxu0 0
        %357 = vmatpush1.bf16.msra.mxu0 0
        %358 = vmatprep.subr.bf16.mxu0 0
        %359 = vmatpush1.bf16.msra.mxu0 0
        %360 = vmatprep.subr.bf16.mxu0 0
        %361 = vmatpush1.bf16.msra.mxu0 0
        %362 = vmatprep.subr.bf16.mxu0 0
        %363 = vmatpush1.bf16.msra.mxu0 0
        %364 = vmatprep.mubr.bf16.mxu0 0
        %365 = vmatmul.mubr.bf16.gmra.mrb[0].mxu0 %v327
        %v366 = vpop.f32.mrb[0].mxu0
        %v367 = vadd.f32 %v311, %v366
        %v368 = vpop.f32.mrb[0].mxu0
        %v369 = vpop.f32.mrb[0].mxu0
        %v370 = vadd.f32 %v311, %v369
        %v371 = vpop.f32.mrb[0].mxu0
        %372 = vmatprep.mubr.bf16.mxu0 0
        %373 = vmatmul.mubr.bf16.gmra.mrb[0].mxu0 %v330
        %v374 = vpop.f32.mrb[0].mxu0
        %v375 = vadd.f32 %v311, %v374
        %v376 = vpop.f32.mrb[0].mxu0
        %v377 = vpop.f32.mrb[0].mxu0
        %v378 = vadd.f32 %v311, %v377
        %v379 = vpop.f32.mrb[0].mxu0
        %380 = vdwg.mxu0
        %v381 = vmax.f32 %v367, 0.0
        %v382 = vmax.f32 %v370, 0.0
        %v383 = vmax.f32 %v375, 0.0
        %v384 = vmax.f32 %v378, 0.0
        %v385 = vpack.c.bf16 %v382, %v381
        %v386 = vpack.c.bf16 %v384, %v383
        %v387 = vld [vmem:[%s3] sm:$0xf]
        %v388 = vld [vmem:[%s3 + $0x4] sm:$0xf]
        %v389 = vld [vmem:[%s3 + $0x8] sm:$0xf]
        %v390 = vld [vmem:[%s3 + $0xc] sm:$0xf]
        %v391 = vld [vmem:[%s3 + $0x10] sm:$0xf]
        %v392 = vld [vmem:[%s3 + $0x14] sm:$0xf]
        %v393 = vld [vmem:[%s3 + $0x18] sm:$0xf]
        %v394 = vld [vmem:[%s3 + $0x1c] sm:$0xf]
        %v395 = vld [vmem:[%s3 + $0x20] sm:$0xf]
        %v396 = vld [vmem:[%s3 + $0x24] sm:$0xf]
        %v397 = vld [vmem:[%s3 + $0x28] sm:$0xf]
        %v398 = vld [vmem:[%s3 + $0x2c] sm:$0xf]
        %v399 = vld [vmem:[%s3 + $0x30] sm:$0xf]
        %v400 = vld [vmem:[%s3 + $0x34] sm:$0xf]
        %v401 = vld [vmem:[%s3 + $0x38] sm:$0xf]
        %v402 = vld [vmem:[%s3 + $0x3c] sm:$0xf]
        %v403 = vld [vmem:[%s4] sm:$0x1]
        %v405 = vlaneseq
        %v406 = vshrl.u32 %v405, 7
        %v407 = vsub.s32 0, %v406
        %v408 = vrot.slane %v403, %v407
        %v426 = vunpack.c.l.b16 %v387
        %v427 = vunpack.c.l.b16 %v388
        %v428 = vunpack.c.l.b16 %v389
        %v429 = vunpack.c.l.b16 %v390
        %v430 = vunpack.c.l.b16 %v391
        %v431 = vunpack.c.l.b16 %v392
        %v432 = vunpack.c.l.b16 %v393
        %v433 = vunpack.c.l.b16 %v394
        %v434 = vunpack.c.l.b16 %v395
        %v435 = vunpack.c.l.b16 %v396
        %v436 = vunpack.c.l.b16 %v397
        %v437 = vunpack.c.l.b16 %v398
        %v438 = vunpack.c.l.b16 %v399
        %v439 = vunpack.c.l.b16 %v400
        %v440 = vunpack.c.l.b16 %v401
        %v441 = vunpack.c.l.b16 %v402
        %v442 = vpack.c.b16 %v427, %v426
        %v443 = vpack.c.b16 %v429, %v428
        %v444 = vpack.c.b16 %v431, %v430
        %v445 = vpack.c.b16 %v433, %v432
        %v446 = vpack.c.b16 %v435, %v434
        %v447 = vpack.c.b16 %v437, %v436
        %v448 = vpack.c.b16 %v439, %v438
        %v449 = vpack.c.b16 %v441, %v440
        %458 = vmatprep.subr.bf16.mxu0 0
        %459 = vmatpush1.bf16.msra.mxu0 %v442
        %460 = vmatprep.subr.bf16.mxu0 0
        %461 = vmatpush1.bf16.msra.mxu0 %v443
        %462 = vmatprep.subr.bf16.mxu0 0
        %463 = vmatpush1.bf16.msra.mxu0 %v444
        %464 = vmatprep.subr.bf16.mxu0 0
        %465 = vmatpush1.bf16.msra.mxu0 %v445
        %466 = vmatprep.subr.bf16.mxu0 0
        %467 = vmatpush1.bf16.msra.mxu0 %v446
        %468 = vmatprep.subr.bf16.mxu0 0
        %469 = vmatpush1.bf16.msra.mxu0 %v447
        %470 = vmatprep.subr.bf16.mxu0 0
        %471 = vmatpush1.bf16.msra.mxu0 %v448
        %472 = vmatprep.subr.bf16.mxu0 0
        %473 = vmatpush1.bf16.msra.mxu0 %v449
        %474 = vmatprep.subr.bf16.mxu0 0
        %475 = vmatpush1.bf16.msra.mxu0 0
        %476 = vmatprep.subr.bf16.mxu0 0
        %477 = vmatpush1.bf16.msra.mxu0 0
        %478 = vmatprep.subr.bf16.mxu0 0
        %479 = vmatpush1.bf16.msra.mxu0 0
        %480 = vmatprep.subr.bf16.mxu0 0
        %481 = vmatpush1.bf16.msra.mxu0 0
        %482 = vmatprep.subr.bf16.mxu0 0
        %483 = vmatpush1.bf16.msra.mxu0 0
        %484 = vmatprep.subr.bf16.mxu0 0
        %485 = vmatpush1.bf16.msra.mxu0 0
        %486 = vmatprep.subr.bf16.mxu0 0
        %487 = vmatpush1.bf16.msra.mxu0 0
        %488 = vmatprep.subr.bf16.mxu0 0
        %489 = vmatpush1.bf16.msra.mxu0 0
        %490 = vmatprep.mubr.bf16.mxu0 0
        %491 = vmatmul.mubr.bf16.gmra.mrb[0].mxu0 %v385
        %v492 = vpop.f32.mrb[0].mxu0
        %v493 = vadd.f32 %v408, %v492
        %v494 = vpop.f32.mrb[0].mxu0
        %v495 = vpop.f32.mrb[0].mxu0
        %v496 = vadd.f32 %v408, %v495
        %v497 = vpop.f32.mrb[0].mxu0
        %498 = vmatprep.mubr.bf16.mxu0 0
        %499 = vmatmul.mubr.bf16.gmra.mrb[0].mxu0 %v386
        %v500 = vpop.f32.mrb[0].mxu0
        %v501 = vadd.f32 %v408, %v500
        %v502 = vpop.f32.mrb[0].mxu0
        %v503 = vpop.f32.mrb[0].mxu0
        %v504 = vadd.f32 %v408, %v503
        %v505 = vpop.f32.mrb[0].mxu0
        %506 = vdwg.mxu0
        %v507 = vmax.f32 %v493, 0.0
        %v508 = vmax.f32 %v496, 0.0
        %v509 = vmax.f32 %v501, 0.0
        %v510 = vmax.f32 %v504, 0.0
        %v511 = vpack.c.bf16 %v508, %v507
        %v512 = vpack.c.bf16 %v510, %v509
        %v513 = vld [vmem:[%s5] sm:$0xf]
        %v514 = vld [vmem:[%s5 + $0x4] sm:$0xf]
        %v515 = vld [vmem:[%s5 + $0x8] sm:$0xf]
        %v516 = vld [vmem:[%s5 + $0xc] sm:$0xf]
        %v517 = vld [vmem:[%s5 + $0x10] sm:$0xf]
        %v518 = vld [vmem:[%s5 + $0x14] sm:$0xf]
        %v519 = vld [vmem:[%s5 + $0x18] sm:$0xf]
        %v520 = vld [vmem:[%s5 + $0x1c] sm:$0xf]
        %v521 = vld [vmem:[%s5 + $0x20] sm:$0xf]
        %v522 = vld [vmem:[%s5 + $0x24] sm:$0xf]
        %v523 = vld [vmem:[%s5 + $0x28] sm:$0xf]
        %v524 = vld [vmem:[%s5 + $0x2c] sm:$0xf]
        %v525 = vld [vmem:[%s5 + $0x30] sm:$0xf]
        %v526 = vld [vmem:[%s5 + $0x34] sm:$0xf]
        %v527 = vld [vmem:[%s5 + $0x38] sm:$0xf]
        %v528 = vld [vmem:[%s5 + $0x3c] sm:$0xf]
        %v529 = vld [vmem:[%s6] sm:$0x1]
        %v531 = vlaneseq
        %v532 = vshrl.u32 %v531, 7
        %v533 = vsub.s32 0, %v532
        %v534 = vrot.slane %v529, %v533
        %v552 = vunpack.c.l.b16 %v513
        %v553 = vunpack.c.l.b16 %v514
        %v554 = vunpack.c.l.b16 %v515
        %v555 = vunpack.c.l.b16 %v516
        %v556 = vunpack.c.l.b16 %v517
        %v557 = vunpack.c.l.b16 %v518
        %v558 = vunpack.c.l.b16 %v519
        %v559 = vunpack.c.l.b16 %v520
        %v560 = vunpack.c.l.b16 %v521
        %v561 = vunpack.c.l.b16 %v522
        %v562 = vunpack.c.l.b16 %v523
        %v563 = vunpack.c.l.b16 %v524
        %v564 = vunpack.c.l.b16 %v525
        %v565 = vunpack.c.l.b16 %v526
        %v566 = vunpack.c.l.b16 %v527
        %v567 = vunpack.c.l.b16 %v528
        %v568 = vpack.c.b16 %v553, %v552
        %v569 = vpack.c.b16 %v555, %v554
        %v570 = vpack.c.b16 %v557, %v556
        %v571 = vpack.c.b16 %v559, %v558
        %v572 = vpack.c.b16 %v561, %v560
        %v573 = vpack.c.b16 %v563, %v562
        %v574 = vpack.c.b16 %v565, %v564
        %v575 = vpack.c.b16 %v567, %v566
        %584 = vmatprep.subr.bf16.mxu0 0
        %585 = vmatpush1.bf16.msra.mxu0 %v568
        %586 = vmatprep.subr.bf16.mxu0 0
        %587 = vmatpush1.bf16.msra.mxu0 %v569
        %588 = vmatprep.subr.bf16.mxu0 0
        %589 = vmatpush1.bf16.msra.mxu0 %v570
        %590 = vmatprep.subr.bf16.mxu0 0
        %591 = vmatpush1.bf16.msra.mxu0 %v571
        %592 = vmatprep.subr.bf16.mxu0 0
        %593 = vmatpush1.bf16.msra.mxu0 %v572
        %594 = vmatprep.subr.bf16.mxu0 0
        %595 = vmatpush1.bf16.msra.mxu0 %v573
        %596 = vmatprep.subr.bf16.mxu0 0
        %597 = vmatpush1.bf16.msra.mxu0 %v574
        %598 = vmatprep.subr.bf16.mxu0 0
        %599 = vmatpush1.bf16.msra.mxu0 %v575
        %600 = vmatprep.subr.bf16.mxu0 0
        %601 = vmatpush1.bf16.msra.mxu0 0
        %602 = vmatprep.subr.bf16.mxu0 0
        %603 = vmatpush1.bf16.msra.mxu0 0
        %604 = vmatprep.subr.bf16.mxu0 0
        %605 = vmatpush1.bf16.msra.mxu0 0
        %606 = vmatprep.subr.bf16.mxu0 0
        %607 = vmatpush1.bf16.msra.mxu0 0
        %608 = vmatprep.subr.bf16.mxu0 0
        %609 = vmatpush1.bf16.msra.mxu0 0
        %610 = vmatprep.subr.bf16.mxu0 0
        %611 = vmatpush1.bf16.msra.mxu0 0
        %612 = vmatprep.subr.bf16.mxu0 0
        %613 = vmatpush1.bf16.msra.mxu0 0
        %614 = vmatprep.subr.bf16.mxu0 0
        %615 = vmatpush1.bf16.msra.mxu0 0
        %616 = vmatprep.mubr.bf16.mxu0 0
        %617 = vmatmul.mubr.bf16.gmra.mrb[0].mxu0 %v511
        %v618 = vpop.f32.mrb[0].mxu0
        %v619 = vadd.f32 %v534, %v618
        %v620 = vpop.f32.mrb[0].mxu0
        %v621 = vpop.f32.mrb[0].mxu0
        %v622 = vadd.f32 %v534, %v621
        %v623 = vpop.f32.mrb[0].mxu0
        %624 = vmatprep.mubr.bf16.mxu0 0
        %625 = vmatmul.mubr.bf16.gmra.mrb[0].mxu0 %v512
        %v626 = vpop.f32.mrb[0].mxu0
        %v627 = vadd.f32 %v534, %v626
        %v628 = vpop.f32.mrb[0].mxu0
        %v629 = vpop.f32.mrb[0].mxu0
        %v630 = vadd.f32 %v534, %v629
        %v631 = vpop.f32.mrb[0].mxu0
        %632 = vdwg.mxu0
        %633 = vst [vmem:[%s287] sm:$0xff] %v619
        %634 = vst [vmem:[%s287 + $0x8] sm:$0xff] %v622
        %635 = vst [vmem:[%s287 + $0x10] sm:$0xff] %v627
        %636 = vst [vmem:[%s287 + $0x18] sm:$0xff] %v630
        %s637 = sand.u32 %s182, 1
        %s638 = scalar_lea.sflag [#allocation4], %s637
        %s639 = sand.u32 %s182, 1
        %s640 = smul.addr %s639, 32
        %s641 = scalar_lea.vmem [#allocation5], %s640
        // Predicated region
        $region53: #{tpu_custom_call.1} parent=47 // pred_check
          %p642 = pneg %p192
        $region54: #{tpu_custom_call.1} parent=47 // pred_check_branch
          %644 = sbr.rel (%p642) target = $region56
        $region55: #{tpu_custom_call.1} parent=47 // pred_region
          %s645 = smul.u32 4, %s22
          %s647 = ssub.s32 512, 512
          %648 = vsyncadd %s638, %s647
          %s649 = smul.addr %s645, 128
          %s650 = scalar_lea.hbm %s7, %s649
          %s651 = sshll.u32 %s641, 4
          %s652 = int_to_ptr.vmem [resolvable:$true] %s651
          %657 = dma.vmem_to_hbm [thread:$0]  %s652, 512, %s650, %s638, 128, 128, 8
        $region56: #{tpu_custom_call.1} parent=47 // pred_fallthru
          _
      $region48: #{tpu_custom_call.1} parent=5 // pred_fallthru
        _
      %p658 = scmp.le.s32.totalorder 2, %s17
      // Predicated region
      $region57: #{tpu_custom_call.1} parent=5 // pred_check
        %p659 = pneg %p658
      $region58: #{tpu_custom_call.1} parent=5 // pred_check_branch
        %661 = sbr.rel (%p659) target = $region60
      $region59: #{tpu_custom_call.1} parent=5 // pred_region
        %s662 = ssub.s32 %s17, 2
        // Predicated region
        $region61: #{tpu_custom_call.1} parent=59 // pred_check
          %p663 = pneg %p198
        $region62: #{tpu_custom_call.1} parent=59 // pred_check_branch
          %665 = sbr.rel (%p663) target = $region64
        $region63: #{tpu_custom_call.1} parent=59 // pred_region
          %s666 = sand.u32 %s183, 1
          %s667 = scalar_lea.sflag [#allocation4], %s666
          %s668 = sand.u32 %s183, 1
          %s669 = smul.addr %s668, 32
          %s670 = scalar_lea.vmem [#allocation5], %s669
          %671 = dma.done %s667, 512
        $region64: #{tpu_custom_call.1} parent=59 // pred_fallthru
          _
      $region60: #{tpu_custom_call.1} parent=5 // pred_fallthru
        _
    $region6: #{tpu_custom_call.1} parent=1 // loop_footer
      %s21 = sadd.s32 1, %s17
    $region7: #{tpu_custom_call.1} parent=1 // loop_footer_branch
      %16 = sbr.rel target = $region3
    $region8: #{tpu_custom_call.1} parent=1 // loop_exit
      _
    %672 = vsyncpa [#allocation3], 1
    %s673 = scalar_lea.sflag [#allocation3], 1
    %674 = vsyncpa %s673, 1
    %675 = vsyncpa [#allocation4], 1
    %s676 = scalar_lea.sflag [#allocation4], 1
    %677 = vsyncpa %s676, 1

</llo_original>
